<compile_context>
chip_gen: v6e
topology: v6e:2x2x1
jax: 0.10.0
libtpu: 0.0.40
codegen_flags: <defaults>
</compile_context>

<pallas_src>
import functools

import jax
import jax.numpy as jnp
from jax.experimental import pallas as pl
from jax.experimental.pallas import tpu as pltpu


def _round_up(x, m):
    return ((x + m - 1) // m) * m


def _mbddpg_kernel(
    state_ref, action_ref,
    ws_ref, bs_ref,
    wc_s_ref, wc_a_ref, bc_ref,
    wh_ref, bh_ref,
    reward_ref, dyn_ref, done_ref,
    *, state_dim,
):
    # h = relu(state @ Ws + bs)
    h = jnp.dot(state_ref[...], ws_ref[...], preferred_element_type=jnp.float32)
    h = jnp.maximum(h + bs_ref[...], 0.0)

    # x = relu(cat([h, action]) @ Wc + bc) == relu(h @ Wc_s + action @ Wc_a + bc)
    x = jnp.dot(h, wc_s_ref[...], preferred_element_type=jnp.float32)
    x = x + jnp.dot(action_ref[...], wc_a_ref[...], preferred_element_type=jnp.float32)
    x = jnp.maximum(x + bc_ref[...], 0.0)
    # dropout: identity (eval mode)

    # Fused heads: single MXU pass producing [dynamics | reward | done_logit]
    heads = jnp.dot(x, wh_ref[...], preferred_element_type=jnp.float32) + bh_ref[...]

    # Static column slices -> three narrow outputs (no padded slab to HBM).
    dyn_ref[...] = heads[:, 0:state_dim].astype(dyn_ref.dtype)
    reward_ref[...] = heads[:, state_dim:state_dim + 1].astype(reward_ref.dtype)
    done_ref[...] = jax.nn.sigmoid(
        heads[:, state_dim + 1:state_dim + 2]).astype(done_ref.dtype)


def _pick_batch_tile(B, state_dim, action_dim, h1, h2, heads_width,
                     max_tile=4096, vmem_budget=12 << 20):
    """Batch tile: multiple of 8, capped, >=2 grid steps when B allows,
    shrunk so double-buffered blocks stay inside default scoped VMEM."""
    if B <= 8:
        return B  # single full block (block dim == array dim is always legal)

    # Aim for at least 2 grid steps (v7x dual-TC megacore), cap the tile.
    tb = min(_round_up(pl.cdiv(B, 2), 8), max_tile)

    def est_bytes(t):
        # double-buffered activation/output blocks + double-buffered weights
        act = t * (state_dim + action_dim + 1 + state_dim + 1) * 4 * 2
        w = (state_dim * h1 + h1 + h1 * h2 + action_dim * h2 + h2
             + h2 * heads_width + heads_width) * 4 * 2
        return act + w

    while tb > 8 and est_bytes(tb) > vmem_budget:
        tb = max(_round_up(tb // 2, 8), 8)
    return tb


def pack_params(params):
    """One-time packing of the three head weights/biases (do this outside the
    per-call forward so inference loops don't re-launch concat ops)."""
    if "wh" in params:
        return params
    p = dict(params)
    # column layout: [ dynamics(state_dim) | reward(1) | done(1) ]
    p["wh"] = jnp.concatenate([params["wd"], params["wr"], params["wdone"]], axis=1)
    p["bh"] = jnp.concatenate([params["bd"], params["br"], params["bdone"]], axis=1)
    return p


def model_forward(state, action, params):
    """state: (B, state_dim), action: (B, action_dim) -> (reward, dynamics, done)."""
    params = pack_params(params)

    B, state_dim = state.shape
    _, action_dim = action.shape
    h1 = params["ws"].shape[1]
    h2 = params["wc_s"].shape[1]
    heads_width = state_dim + 2

    tb = _pick_batch_tile(B, state_dim, action_dim, h1, h2, heads_width)
    grid = (pl.cdiv(B, tb),)

    def act_spec(dim):
        return pl.BlockSpec((tb, dim), lambda i: (i, 0))

    def resident_spec(arr):
        # full-array block, constant index -> stays VMEM-resident across grid steps
        return pl.BlockSpec(arr.shape, lambda i: (0, 0))

    in_specs = [
        act_spec(state_dim),            # state
        act_spec(action_dim),           # action
        resident_spec(params["ws"]),    # ws
        resident_spec(params["bs"]),    # bs
        resident_spec(params["wc_s"]),  # wc_s
        resident_spec(params["wc_a"]),  # wc_a
        resident_spec(params["bc"]),    # bc
        resident_spec(params["wh"]),    # fused head weight
        resident_spec(params["bh"]),    # fused head bias
    ]
    out_specs = [
        pl.BlockSpec((tb, 1), lambda i: (i, 0)),          # reward
        pl.BlockSpec((tb, state_dim), lambda i: (i, 0)),  # dynamics
        pl.BlockSpec((tb, 1), lambda i: (i, 0)),          # done
    ]
    out_shape = (
        jax.ShapeDtypeStruct((B, 1), jnp.float32),
        jax.ShapeDtypeStruct((B, state_dim), jnp.float32),
        jax.ShapeDtypeStruct((B, 1), jnp.float32),
    )

    kernel = functools.partial(_mbddpg_kernel, state_dim=state_dim)

    reward, dynamics, done = pl.pallas_call(
        kernel,
        out_shape=out_shape,
        grid=grid,
        in_specs=in_specs,
        out_specs=out_specs,
        compiler_params=pltpu.CompilerParams(
            dimension_semantics=("parallel",),   # v7x: shard batch across 2 TCs
        ),
    )(
        state, action,
        params["ws"], params["bs"],
        params["wc_s"], params["wc_a"], params["bc"],
        params["wh"], params["bh"],
    )
    return reward, dynamics, done


def init_params(key, state_dim, action_dim, h1, h2, init_w=1e-4):
    """Deterministic synthetic init matching the PyTorch module's shapes.

    Weights are stored transposed, i.e. (in_features, out_features).
    linear_common's weight is split into the h1-part and the action-part.
    """
    ks = jax.random.split(key, 10)

    def fanin_uniform(k, shape, fan_in):
        bound = 1.0 / jnp.sqrt(jnp.float32(fan_in))
        return jax.random.uniform(k, shape, jnp.float32, -bound, bound)

    # linear_state: (state_dim -> h1), fanin_ init
    ws = fanin_uniform(ks[0], (state_dim, h1), state_dim)
    bs = fanin_uniform(ks[1], (1, h1), state_dim)

    # linear_common: (h1 + action_dim -> h2), fanin_ init; split by input block
    wc = fanin_uniform(ks[2], (h1 + action_dim, h2), h1 + action_dim)
    wc_s, wc_a = wc[:h1], wc[h1:]
    bc = fanin_uniform(ks[3], (1, h2), h1 + action_dim)

    # heads: uniform(-init_w, init_w) for weights; default bias init for biases
    wr = jax.random.uniform(ks[4], (h2, 1), jnp.float32, -init_w, init_w)
    br = fanin_uniform(ks[5], (1, 1), h2)
    wd = jax.random.uniform(ks[6], (h2, state_dim), jnp.float32, -init_w, init_w)
    bd = fanin_uniform(ks[7], (1, state_dim), h2)
    wdone = jax.random.uniform(ks[8], (h2, 1), jnp.float32, -init_w, init_w)
    bdone = fanin_uniform(ks[9], (1, 1), h2)

    return dict(
        ws=ws, bs=bs, wc_s=wc_s, wc_a=wc_a, bc=bc,
        wr=wr, br=br, wd=wd, bd=bd, wdone=wdone, bdone=bdone,
    )


def _reference_forward(state, action, p):
    """Pure-JAX reference for correctness checking."""
    h = jax.nn.relu(state @ p["ws"] + p["bs"])
    x = jax.nn.relu(h @ p["wc_s"] + action @ p["wc_a"] + p["bc"])
    reward = x @ p["wr"] + p["br"]
    dyn = x @ p["wd"] + p["bd"]
    done = jax.nn.sigmoid(x @ p["wdone"] + p["bdone"])
    return reward, dyn, done


if __name__ == "__main__":
    B, state_dim, action_dim, h1, h2 = 8, 16, 4, 32, 32

    key = jax.random.PRNGKey(0)
    k_state, k_action, k_params = jax.random.split(key, 3)

    state = jax.random.normal(k_state, (B, state_dim), jnp.float32)
    action = jax.random.normal(k_action, (B, action_dim), jnp.float32)
    params = init_params(k_params, state_dim, action_dim, h1, h2)

    # pack head weights once (outside any inner inference loop)
    packed = pack_params(params)

    reward, dynamics, done = model_forward(state, action, packed)
    jax.block_until_ready((reward, dynamics, done))

    # sanity check against pure-JAX reference
    r_ref, d_ref, done_ref = _reference_forward(state, action, params)
    assert reward.shape == (B, 1) and dynamics.shape == (B, state_dim) and done.shape == (B, 1)
    assert jnp.allclose(reward, r_ref, atol=1e-5)
    assert jnp.allclose(dynamics, d_ref, atol=1e-5)
    assert jnp.allclose(done, done_ref, atol=1e-5)

    print("KERNEL_OK")
</pallas_src>

<mosaic_0001>
module attributes {stable_mosaic.version = 11 : i64} {
  func.func @_mbddpg_kernel(%arg0: i32, %arg1: memref<8x16xf32, #tpu.memory_space<vmem>>, %arg2: memref<8x4xf32, #tpu.memory_space<vmem>>, %arg3: memref<16x32xf32, #tpu.memory_space<vmem>>, %arg4: memref<1x32xf32, #tpu.memory_space<vmem>>, %arg5: memref<32x32xf32, #tpu.memory_space<vmem>>, %arg6: memref<4x32xf32, #tpu.memory_space<vmem>>, %arg7: memref<1x32xf32, #tpu.memory_space<vmem>>, %arg8: memref<32x18xf32, #tpu.memory_space<vmem>>, %arg9: memref<1x18xf32, #tpu.memory_space<vmem>>, %arg10: memref<8x1xf32, #tpu.memory_space<vmem>>, %arg11: memref<8x16xf32, #tpu.memory_space<vmem>>, %arg12: memref<8x1xf32, #tpu.memory_space<vmem>>) attributes {dimension_semantics = [#tpu.dimension_semantics<parallel>], iteration_bounds = array<i64: 1>, scalar_prefetch = 0 : i64, scratch_operands = 0 : i64, tpu.core_type = #tpu.core_type<tc>, window_params = [{transform_indices = @transform_0, window_bounds = array<i64: 8, 16>}, {transform_indices = @transform_1, window_bounds = array<i64: 8, 4>}, {pipeline_mode = #tpu.pipeline_mode<synchronous>, transform_indices = @transform_2, window_bounds = array<i64: 16, 32>}, {pipeline_mode = #tpu.pipeline_mode<synchronous>, transform_indices = @transform_3, window_bounds = array<i64: 1, 32>}, {pipeline_mode = #tpu.pipeline_mode<synchronous>, transform_indices = @transform_4, window_bounds = array<i64: 32, 32>}, {pipeline_mode = #tpu.pipeline_mode<synchronous>, transform_indices = @transform_5, window_bounds = array<i64: 4, 32>}, {pipeline_mode = #tpu.pipeline_mode<synchronous>, transform_indices = @transform_6, window_bounds = array<i64: 1, 32>}, {pipeline_mode = #tpu.pipeline_mode<synchronous>, transform_indices = @transform_7, window_bounds = array<i64: 32, 18>}, {pipeline_mode = #tpu.pipeline_mode<synchronous>, transform_indices = @transform_8, window_bounds = array<i64: 1, 18>}, {transform_indices = @transform_9, window_bounds = array<i64: 8, 1>}, {transform_indices = @transform_10, window_bounds = array<i64: 8, 16>}, {transform_indices = @transform_11, window_bounds = array<i64: 8, 1>}]} {
    %c0 = arith.constant 0 : index
    %c0_0 = arith.constant 0 : index
    %0 = vector.load %arg1[%c0, %c0_0] : memref<8x16xf32, #tpu.memory_space<vmem>>, vector<8x16xf32>
    %c0_1 = arith.constant 0 : index
    %c0_2 = arith.constant 0 : index
    %1 = vector.load %arg3[%c0_1, %c0_2] : memref<16x32xf32, #tpu.memory_space<vmem>>, vector<16x32xf32>
    %cst = arith.constant dense<0.000000e+00> : vector<8x32xf32>
    %2 = tpu.matmul %0, %1, %cst {dimension_numbers = #tpu.dot_dimension_numbers<[1], [0], [0], [1], [0, 0, 1, 1], [], []>} : vector<8x16xf32>, vector<16x32xf32>, vector<8x32xf32> -> vector<8x32xf32>
    %c0_3 = arith.constant 0 : index
    %c0_4 = arith.constant 0 : index
    %3 = vector.load %arg4[%c0_3, %c0_4] : memref<1x32xf32, #tpu.memory_space<vmem>>, vector<1x32xf32>
    %4 = vector.broadcast %3 : vector<1x32xf32> to vector<8x32xf32>
    %5 = arith.addf %2, %4 : vector<8x32xf32>
    %cst_5 = arith.constant 0.000000e+00 : f32
    %6 = vector.broadcast %cst_5 : f32 to vector<8x32xf32>
    %7 = arith.maximumf %5, %6 : vector<8x32xf32>
    %c0_6 = arith.constant 0 : index
    %c0_7 = arith.constant 0 : index
    %8 = vector.load %arg5[%c0_6, %c0_7] : memref<32x32xf32, #tpu.memory_space<vmem>>, vector<32x32xf32>
    %cst_8 = arith.constant dense<0.000000e+00> : vector<8x32xf32>
    %9 = tpu.matmul %7, %8, %cst_8 {dimension_numbers = #tpu.dot_dimension_numbers<[1], [0], [0], [1], [0, 0, 1, 1], [], []>} : vector<8x32xf32>, vector<32x32xf32>, vector<8x32xf32> -> vector<8x32xf32>
    %c0_9 = arith.constant 0 : index
    %c0_10 = arith.constant 0 : index
    %10 = vector.load %arg2[%c0_9, %c0_10] : memref<8x4xf32, #tpu.memory_space<vmem>>, vector<8x4xf32>
    %c0_11 = arith.constant 0 : index
    %c0_12 = arith.constant 0 : index
    %11 = vector.load %arg6[%c0_11, %c0_12] : memref<4x32xf32, #tpu.memory_space<vmem>>, vector<4x32xf32>
    %cst_13 = arith.constant dense<0.000000e+00> : vector<8x32xf32>
    %12 = tpu.matmul %10, %11, %cst_13 {dimension_numbers = #tpu.dot_dimension_numbers<[1], [0], [0], [1], [0, 0, 1, 1], [], []>} : vector<8x4xf32>, vector<4x32xf32>, vector<8x32xf32> -> vector<8x32xf32>
    %13 = arith.addf %9, %12 : vector<8x32xf32>
    %c0_14 = arith.constant 0 : index
    %c0_15 = arith.constant 0 : index
    %14 = vector.load %arg7[%c0_14, %c0_15] : memref<1x32xf32, #tpu.memory_space<vmem>>, vector<1x32xf32>
    %15 = vector.broadcast %14 : vector<1x32xf32> to vector<8x32xf32>
    %16 = arith.addf %13, %15 : vector<8x32xf32>
    %cst_16 = arith.constant 0.000000e+00 : f32
    %17 = vector.broadcast %cst_16 : f32 to vector<8x32xf32>
    %18 = arith.maximumf %16, %17 : vector<8x32xf32>
    %c0_17 = arith.constant 0 : index
    %c0_18 = arith.constant 0 : index
    %19 = vector.load %arg8[%c0_17, %c0_18] : memref<32x18xf32, #tpu.memory_space<vmem>>, vector<32x18xf32>
    %cst_19 = arith.constant dense<0.000000e+00> : vector<8x18xf32>
    %20 = tpu.matmul %18, %19, %cst_19 {dimension_numbers = #tpu.dot_dimension_numbers<[1], [0], [0], [1], [0, 0, 1, 1], [], []>} : vector<8x32xf32>, vector<32x18xf32>, vector<8x18xf32> -> vector<8x18xf32>
    %c0_20 = arith.constant 0 : index
    %c0_21 = arith.constant 0 : index
    %21 = vector.load %arg9[%c0_20, %c0_21] : memref<1x18xf32, #tpu.memory_space<vmem>>, vector<1x18xf32>
    %22 = vector.broadcast %21 : vector<1x18xf32> to vector<8x18xf32>
    %23 = arith.addf %20, %22 : vector<8x18xf32>
    %24 = vector.extract_strided_slice %23 {offsets = [0, 0], sizes = [8, 16], strides = [1, 1]} : vector<8x18xf32> to vector<8x16xf32>
    %c0_22 = arith.constant 0 : index
    %c0_23 = arith.constant 0 : index
    %25 = vector.load %arg11[%c0_22, %c0_23] : memref<8x16xf32, #tpu.memory_space<vmem>>, vector<8x16xf32>
    tpu.vector_store %arg11[%c0_22, %c0_23], %24 {strides = array<i32>} : memref<8x16xf32, #tpu.memory_space<vmem>>, vector<8x16xf32>,
    %26 = vector.extract_strided_slice %23 {offsets = [0, 16], sizes = [8, 1], strides = [1, 1]} : vector<8x18xf32> to vector<8x1xf32>
    %c0_24 = arith.constant 0 : index
    %c0_25 = arith.constant 0 : index
    %27 = vector.load %arg10[%c0_24, %c0_25] : memref<8x1xf32, #tpu.memory_space<vmem>>, vector<8x1xf32>
    tpu.vector_store %arg10[%c0_24, %c0_25], %26 {strides = array<i32>} : memref<8x1xf32, #tpu.memory_space<vmem>>, vector<8x1xf32>,
    %28 = vector.extract_strided_slice %23 {offsets = [0, 17], sizes = [8, 1], strides = [1, 1]} : vector<8x18xf32> to vector<8x1xf32>
    %29 = arith.negf %28 : vector<8x1xf32>
    %30 = math.exp %29 : vector<8x1xf32>
    %cst_26 = arith.constant 1.000000e+00 : f32
    %31 = vector.broadcast %cst_26 : f32 to vector<8x1xf32>
    %32 = arith.addf %31, %30 : vector<8x1xf32>
    %33 = arith.divf %31, %32 : vector<8x1xf32>
    %c0_27 = arith.constant 0 : index
    %c0_28 = arith.constant 0 : index
    %34 = vector.load %arg12[%c0_27, %c0_28] : memref<8x1xf32, #tpu.memory_space<vmem>>, vector<8x1xf32>
    tpu.vector_store %arg12[%c0_27, %c0_28], %33 {strides = array<i32>} : memref<8x1xf32, #tpu.memory_space<vmem>>, vector<8x1xf32>,
    return
  }
  func.func @transform_0(%arg0: i32) -> (i32, i32) {
    %c0_i32 = arith.constant 0 : i32
    %c0_i32_0 = arith.constant 0 : i32
    return %arg0, %c0_i32 : i32, i32
  }
  func.func @transform_1(%arg0: i32) -> (i32, i32) {
    %c0_i32 = arith.constant 0 : i32
    %c0_i32_0 = arith.constant 0 : i32
    return %arg0, %c0_i32 : i32, i32
  }
  func.func @transform_2(%arg0: i32) -> (i32, i32) {
    %c0_i32 = arith.constant 0 : i32
    %c0_i32_0 = arith.constant 0 : i32
    %c0_i32_1 = arith.constant 0 : i32
    return %c0_i32, %c0_i32_0 : i32, i32
  }
  func.func @transform_3(%arg0: i32) -> (i32, i32) {
    %c0_i32 = arith.constant 0 : i32
    %c0_i32_0 = arith.constant 0 : i32
    %c0_i32_1 = arith.constant 0 : i32
    return %c0_i32, %c0_i32_0 : i32, i32
  }
  func.func @transform_4(%arg0: i32) -> (i32, i32) {
    %c0_i32 = arith.constant 0 : i32
    %c0_i32_0 = arith.constant 0 : i32
    %c0_i32_1 = arith.constant 0 : i32
    return %c0_i32, %c0_i32_0 : i32, i32
  }
  func.func @transform_5(%arg0: i32) -> (i32, i32) {
    %c0_i32 = arith.constant 0 : i32
    %c0_i32_0 = arith.constant 0 : i32
    %c0_i32_1 = arith.constant 0 : i32
    return %c0_i32, %c0_i32_0 : i32, i32
  }
  func.func @transform_6(%arg0: i32) -> (i32, i32) {
    %c0_i32 = arith.constant 0 : i32
    %c0_i32_0 = arith.constant 0 : i32
    %c0_i32_1 = arith.constant 0 : i32
    return %c0_i32, %c0_i32_0 : i32, i32
  }
  func.func @transform_7(%arg0: i32) -> (i32, i32) {
    %c0_i32 = arith.constant 0 : i32
    %c0_i32_0 = arith.constant 0 : i32
    %c0_i32_1 = arith.constant 0 : i32
    return %c0_i32, %c0_i32_0 : i32, i32
  }
  func.func @transform_8(%arg0: i32) -> (i32, i32) {
    %c0_i32 = arith.constant 0 : i32
    %c0_i32_0 = arith.constant 0 : i32
    %c0_i32_1 = arith.constant 0 : i32
    return %c0_i32, %c0_i32_0 : i32, i32
  }
  func.func @transform_9(%arg0: i32) -> (i32, i32) {
    %c0_i32 = arith.constant 0 : i32
    %c0_i32_0 = arith.constant 0 : i32
    return %arg0, %c0_i32 : i32, i32
  }
  func.func @transform_10(%arg0: i32) -> (i32, i32) {
    %c0_i32 = arith.constant 0 : i32
    %c0_i32_0 = arith.constant 0 : i32
    return %arg0, %c0_i32 : i32, i32
  }
  func.func @transform_11(%arg0: i32) -> (i32, i32) {
    %c0_i32 = arith.constant 0 : i32
    %c0_i32_0 = arith.constant 0 : i32
    return %arg0, %c0_i32 : i32, i32
  }
}

</mosaic_0001>

<llo_original>
// kernel: tpu_custom_call.1
$region0: #{tpu_custom_call.1}
  #allocation0 [shape = 'u32[]', space=smem, size = 0x4, offset = 0x4, fixed_abs, tag = 'smem constant byte address 0x4 - core index']
  #allocation1 [shape = 'u32[144,128]{1,0:T(1,128)}', space=vmem, size = 0x12000, scoped, tag = 'internal scratch']
  %s0 = inlined_call_operand.vmem [shape: f32[8,16], index: 0, kind: input, shape index: {}]
  %s1 = inlined_call_operand.vmem [shape: f32[8,4], index: 1, kind: input, shape index: {}]
  %s2 = inlined_call_operand.vmem [shape: f32[16,32], index: 2, kind: input, shape index: {}]
  %s3 = inlined_call_operand.hbm [shape: f32[1,32], index: 3, kind: input, shape index: {}]
  %s4 = inlined_call_operand.vmem [shape: f32[32,32], index: 4, kind: input, shape index: {}]
  %s5 = inlined_call_operand.hbm [shape: f32[4,32], index: 5, kind: input, shape index: {}]
  %s6 = inlined_call_operand.hbm [shape: f32[1,32], index: 6, kind: input, shape index: {}]
  %s7 = inlined_call_operand.vmem [shape: f32[32,18], index: 7, kind: input, shape index: {}]
  %s8 = inlined_call_operand.vmem [shape: f32[1,18], index: 8, kind: input, shape index: {}]
  %s9 = inlined_call_operand.vmem [shape: f32[8,1], index: 9, kind: output, shape index: {0}]
  %s10 = inlined_call_operand.hbm [shape: f32[8,16], index: 10, kind: output, shape index: {1}]
  %s11 = inlined_call_operand.vmem [shape: f32[8,1], index: 11, kind: output, shape index: {2}]
  %12 = xla_tuple %s9, %s10, %s11
  %s13 = sld [smem:[#allocation0]]
  $region74: #{tpu_custom_call.1} parent=0
    _
  %s15 = ssub.s32 1, %s13
  %s16 = scalar_select 0, %s15, %s13
  $region1: #{tpu_custom_call.1} parent=0
    #allocation2 [shape = 'u8[512]{0}', space=vmem, size = 0x400, scoped, tag = 'input window, operand 3, single buffered']
    #allocation3 [shape = 's32[1]{0}', space=sflag, size = 0x4, scoped, tag = 'scoped memory for tpu_custom_call.1']
    #allocation4 [shape = 's32[1]{0}', space=sflag, size = 0x4, scoped, tag = 'scoped memory for tpu_custom_call.1']
    #allocation5 [shape = 'u8[2048]{0}', space=vmem, size = 0x800, scoped, tag = 'input window, operand 5, single buffered']
    #allocation6 [shape = 's32[1]{0}', space=sflag, size = 0x4, scoped, tag = 'scoped memory for tpu_custom_call.1']
    #allocation7 [shape = 'u8[512]{0}', space=vmem, size = 0x400, scoped, tag = 'input window, operand 6, single buffered']
    #allocation8 [shape = 'u8[4096]{0}', space=vmem, size = 0x1000, scoped, tag = 'output window, operand 1, single buffered']
    %17 = vsyncpa [#allocation3], 0
    %18 = vsyncpa [#allocation6], 0
    %19 = vsyncpa [#allocation4], 0
    // Predicated region
    $region2: #{tpu_custom_call.1} parent=1 // pred_check
      _
    $region3: #{tpu_custom_call.1} parent=1 // pred_check_branch
      %21 = sbr.rel (0) target = $region5
    $region4: #{tpu_custom_call.1} parent=1 // pred_region
      _
    $region5: #{tpu_custom_call.1} parent=1 // pred_fallthru
      _
    // Predicated region
    $region6: #{tpu_custom_call.1} parent=1 // pred_check
      _
    $region7: #{tpu_custom_call.1} parent=1 // pred_check_branch
      %23 = sbr.rel (0) target = $region9
    $region8: #{tpu_custom_call.1} parent=1 // pred_region
      _
    $region9: #{tpu_custom_call.1} parent=1 // pred_fallthru
      _
    // Predicated region
    $region10: #{tpu_custom_call.1} parent=1 // pred_check
      _
    $region11: #{tpu_custom_call.1} parent=1 // pred_check_branch
      %25 = sbr.rel (0) target = $region13
    $region12: #{tpu_custom_call.1} parent=1 // pred_region
      _
    $region13: #{tpu_custom_call.1} parent=1 // pred_fallthru
      _
    // Predicated region
    $region14: #{tpu_custom_call.1} parent=1 // pred_check
      _
    $region15: #{tpu_custom_call.1} parent=1 // pred_check_branch
      %27 = sbr.rel (0) target = $region17
    $region16: #{tpu_custom_call.1} parent=1 // pred_region
      %s29 = ssub.s32 16, 16
      %30 = vsyncadd [#allocation3], %s29
      %s32 = sshll.u32 [#allocation2], 4
      %s33 = int_to_ptr.vmem [resolvable:$true] %s32
      %35 = dma.hbm_to_vmem [thread:$0]  %s3, 16, %s33, [#allocation3]
    $region17: #{tpu_custom_call.1} parent=1 // pred_fallthru
      _
    // Predicated region
    $region18: #{tpu_custom_call.1} parent=1 // pred_check
      _
    $region19: #{tpu_custom_call.1} parent=1 // pred_check_branch
      %37 = sbr.rel (0) target = $region21
    $region20: #{tpu_custom_call.1} parent=1 // pred_region
      _
    $region21: #{tpu_custom_call.1} parent=1 // pred_fallthru
      _
    // Predicated region
    $region22: #{tpu_custom_call.1} parent=1 // pred_check
      _
    $region23: #{tpu_custom_call.1} parent=1 // pred_check_branch
      %39 = sbr.rel (0) target = $region25
    $region24: #{tpu_custom_call.1} parent=1 // pred_region
      %s41 = ssub.s32 64, 64
      %42 = vsyncadd [#allocation6], %s41
      %s44 = sshll.u32 [#allocation5], 4
      %s45 = int_to_ptr.vmem [resolvable:$true] %s44
      %47 = dma.hbm_to_vmem [thread:$0]  %s5, 64, %s45, [#allocation6]
    $region25: #{tpu_custom_call.1} parent=1 // pred_fallthru
      _
    // Predicated region
    $region26: #{tpu_custom_call.1} parent=1 // pred_check
      _
    $region27: #{tpu_custom_call.1} parent=1 // pred_check_branch
      %49 = sbr.rel (0) target = $region29
    $region28: #{tpu_custom_call.1} parent=1 // pred_region
      %s51 = ssub.s32 16, 16
      %52 = vsyncadd [#allocation6], %s51
      %s54 = sshll.u32 [#allocation7], 4
      %s55 = int_to_ptr.vmem [resolvable:$true] %s54
      %57 = dma.hbm_to_vmem [thread:$0]  %s6, 16, %s55, [#allocation6]
    $region29: #{tpu_custom_call.1} parent=1 // pred_fallthru
      _
    // Predicated region
    $region30: #{tpu_custom_call.1} parent=1 // pred_check
      _
    $region31: #{tpu_custom_call.1} parent=1 // pred_check_branch
      %59 = sbr.rel (0) target = $region33
    $region32: #{tpu_custom_call.1} parent=1 // pred_region
      _
    $region33: #{tpu_custom_call.1} parent=1 // pred_fallthru
      _
    // Predicated region
    $region34: #{tpu_custom_call.1} parent=1 // pred_check
      _
    $region35: #{tpu_custom_call.1} parent=1 // pred_check_branch
      %61 = sbr.rel (0) target = $region37
    $region36: #{tpu_custom_call.1} parent=1 // pred_region
      _
    $region37: #{tpu_custom_call.1} parent=1 // pred_fallthru
      _
    // Predicated region
    $region38: #{tpu_custom_call.1} parent=1 // pred_check
      _
    $region39: #{tpu_custom_call.1} parent=1 // pred_check_branch
      %63 = sbr.rel (0) target = $region41
    $region40: #{tpu_custom_call.1} parent=1 // pred_region
      %64 = dma.done [#allocation3], 16
    $region41: #{tpu_custom_call.1} parent=1 // pred_fallthru
      _
    // Predicated region
    $region42: #{tpu_custom_call.1} parent=1 // pred_check
      _
    $region43: #{tpu_custom_call.1} parent=1 // pred_check_branch
      %66 = sbr.rel (0) target = $region45
    $region44: #{tpu_custom_call.1} parent=1 // pred_region
      %67 = dma.done [#allocation6], 64
    $region45: #{tpu_custom_call.1} parent=1 // pred_fallthru
      _
    // Predicated region
    $region46: #{tpu_custom_call.1} parent=1 // pred_check
      _
    $region47: #{tpu_custom_call.1} parent=1 // pred_check_branch
      %69 = sbr.rel (0) target = $region49
    $region48: #{tpu_custom_call.1} parent=1 // pred_region
      %70 = dma.done [#allocation6], 16
    $region49: #{tpu_custom_call.1} parent=1 // pred_fallthru
      _
    %v71 = vld [vmem:[%s0] sm:$0xff]
    %v72 = vld [vmem:[%s2] sm:$0xff]
    %v73 = vld [vmem:[%s2 + $0x8] sm:$0xff]
    %v74 = vld [vmem:[#allocation2] sm:$0x1]
    %v76 = vlaneseq
    %v77 = vshrl.u32 %v76, 7
    %v78 = vsub.s32 0, %v77
    %v79 = vrot.slane %v74, %v78
    %vm81 = vcmask 130048
    %v83 = vsel %vm81, %v71, 0
    %85 = vmatprep.subr.mxu0 0.0
    %86 = vmatpush1.msra.mxu0 0.0
    %87 = vmatprep.subr.mxu0 0.0
    %88 = vmatpush1.msra.mxu0 0.0
    %89 = vmatprep.subr.mxu0 0.0
    %90 = vmatpush1.msra.mxu0 0.0
    %91 = vmatprep.subr.mxu0 0.0
    %92 = vmatpush1.msra.mxu0 0.0
    %93 = vmatprep.subr.mxu0 0.0
    %94 = vmatpush1.msra.mxu0 0.0
    %95 = vmatprep.subr.mxu0 0.0
    %96 = vmatpush1.msra.mxu0 0.0
    %97 = vmatprep.subr.mxu0 0.0
    %98 = vmatpush1.msra.mxu0 0.0
    %99 = vmatprep.subr.mxu0 0.0
    %100 = vmatpush1.msra.mxu0 0.0
    %101 = vmatprep.subr.mxu0 0.0
    %102 = vmatpush1.msra.mxu0 0.0
    %103 = vmatprep.subr.mxu0 0.0
    %104 = vmatpush1.msra.mxu0 0.0
    %105 = vmatprep.subr.mxu0 0.0
    %106 = vmatpush1.msra.mxu0 0.0
    %107 = vmatprep.subr.mxu0 0.0
    %108 = vmatpush1.msra.mxu0 0.0
    %109 = vmatprep.subr.mxu0 0.0
    %110 = vmatpush1.msra.mxu0 0.0
    %111 = vmatprep.subr.mxu0 0.0
    %112 = vmatpush1.msra.mxu0 0.0
    %113 = vmatprep.subr.mxu0 0.0
    %114 = vmatpush1.msra.mxu0 %v73
    %115 = vmatprep.subr.mxu0 0.0
    %116 = vmatpush1.msra.mxu0 %v72
    %117 = vmatprep.subr.mxu0 0.0
    %118 = vmatpush2.msra.mxu0 0.0
    %119 = vmatprep.subr.mxu0 0.0
    %120 = vmatpush2.msra.mxu0 0.0
    %121 = vmatprep.subr.mxu0 0.0
    %122 = vmatpush2.msra.mxu0 0.0
    %123 = vmatprep.subr.mxu0 0.0
    %124 = vmatpush2.msra.mxu0 0.0
    %125 = vmatprep.subr.mxu0 0.0
    %126 = vmatpush2.msra.mxu0 0.0
    %127 = vmatprep.subr.mxu0 0.0
    %128 = vmatpush2.msra.mxu0 0.0
    %129 = vmatprep.subr.mxu0 0.0
    %130 = vmatpush2.msra.mxu0 0.0
    %131 = vmatprep.subr.mxu0 0.0
    %132 = vmatpush2.msra.mxu0 0.0
    %133 = vmatprep.subr.mxu0 0.0
    %134 = vmatpush2.msra.mxu0 0.0
    %135 = vmatprep.subr.mxu0 0.0
    %136 = vmatpush2.msra.mxu0 0.0
    %137 = vmatprep.subr.mxu0 0.0
    %138 = vmatpush2.msra.mxu0 0.0
    %139 = vmatprep.subr.mxu0 0.0
    %140 = vmatpush2.msra.mxu0 0.0
    %141 = vmatprep.subr.mxu0 0.0
    %142 = vmatpush2.msra.mxu0 0.0
    %143 = vmatprep.subr.mxu0 0.0
    %144 = vmatpush2.msra.mxu0 0.0
    %145 = vmatprep.subr.mxu0 0.0
    %146 = vmatpush2.msra.mxu0 0.0
    %147 = vmatprep.subr.mxu0 0.0
    %148 = vmatpush2.msra.mxu0 0.0
    %149 = vmatprep.mubr.f32.mxu0 0.0
    %150 = vmatmul.mubr.f32.gmra.mxu0 %v83
    %v151 = vpop.f32.mrf.mxu0
    %v152 = vadd.f32 %v79, %v151
    %v153 = vpop.f32.mrf.mxu0
    %154 = vdwg.mxu0
    %v155 = vmax.f32 %v152, 0.0
    %v156 = vld [vmem:[%s4] sm:$0xff]
    %v157 = vld [vmem:[%s4 + $0x8] sm:$0xff]
    %v158 = vld [vmem:[%s4 + $0x10] sm:$0xff]
    %v159 = vld [vmem:[%s4 + $0x18] sm:$0xff]
    %v160 = vld [vmem:[%s1] sm:$0xff]
    %v161 = vld [vmem:[#allocation5] sm:$0xf]
    %vm162 = vcmask 31744
    %v164 = vsel %vm162, %v160, 0
    %vm166 = vcmask 1043456
    %v168 = vsel %vm166, %v161, 0
    %170 = vmatprep.subr.mxu0 0.0
    %171 = vmatpush1.msra.mxu0 0.0
    %172 = vmatprep.subr.mxu0 0.0
    %173 = vmatpush1.msra.mxu0 0.0
    %174 = vmatprep.subr.mxu0 0.0
    %175 = vmatpush1.msra.mxu0 0.0
    %176 = vmatprep.subr.mxu0 0.0
    %177 = vmatpush1.msra.mxu0 0.0
    %178 = vmatprep.subr.mxu0 0.0
    %179 = vmatpush1.msra.mxu0 0.0
    %180 = vmatprep.subr.mxu0 0.0
    %181 = vmatpush1.msra.mxu0 0.0
    %182 = vmatprep.subr.mxu0 0.0
    %183 = vmatpush1.msra.mxu0 0.0
    %184 = vmatprep.subr.mxu0 0.0
    %185 = vmatpush1.msra.mxu0 0.0
    %186 = vmatprep.subr.mxu0 0.0
    %187 = vmatpush1.msra.mxu0 0.0
    %188 = vmatprep.subr.mxu0 0.0
    %189 = vmatpush1.msra.mxu0 0.0
    %190 = vmatprep.subr.mxu0 0.0
    %191 = vmatpush1.msra.mxu0 0.0
    %192 = vmatprep.subr.mxu0 0.0
    %193 = vmatpush1.msra.mxu0 0.0
    %194 = vmatprep.subr.mxu0 0.0
    %195 = vmatpush1.msra.mxu0 0.0
    %196 = vmatprep.subr.mxu0 0.0
    %197 = vmatpush1.msra.mxu0 0.0
    %198 = vmatprep.subr.mxu0 0.0
    %199 = vmatpush1.msra.mxu0 0.0
    %200 = vmatprep.subr.mxu0 0.0
    %201 = vmatpush1.msra.mxu0 %v168
    %202 = vmatprep.subr.mxu0 0.0
    %203 = vmatpush2.msra.mxu0 0.0
    %204 = vmatprep.subr.mxu0 0.0
    %205 = vmatpush2.msra.mxu0 0.0
    %206 = vmatprep.subr.mxu0 0.0
    %207 = vmatpush2.msra.mxu0 0.0
    %208 = vmatprep.subr.mxu0 0.0
    %209 = vmatpush2.msra.mxu0 0.0
    %210 = vmatprep.subr.mxu0 0.0
    %211 = vmatpush2.msra.mxu0 0.0
    %212 = vmatprep.subr.mxu0 0.0
    %213 = vmatpush2.msra.mxu0 0.0
    %214 = vmatprep.subr.mxu0 0.0
    %215 = vmatpush2.msra.mxu0 0.0
    %216 = vmatprep.subr.mxu0 0.0
    %217 = vmatpush2.msra.mxu0 0.0
    %218 = vmatprep.subr.mxu0 0.0
    %219 = vmatpush2.msra.mxu0 0.0
    %220 = vmatprep.subr.mxu0 0.0
    %221 = vmatpush2.msra.mxu0 0.0
    %222 = vmatprep.subr.mxu0 0.0
    %223 = vmatpush2.msra.mxu0 0.0
    %224 = vmatprep.subr.mxu0 0.0
    %225 = vmatpush2.msra.mxu0 0.0
    %226 = vmatprep.subr.mxu0 0.0
    %227 = vmatpush2.msra.mxu0 0.0
    %228 = vmatprep.subr.mxu0 0.0
    %229 = vmatpush2.msra.mxu0 0.0
    %230 = vmatprep.subr.mxu0 0.0
    %231 = vmatpush2.msra.mxu0 0.0
    %232 = vmatprep.subr.mxu0 0.0
    %233 = vmatpush2.msra.mxu0 0.0
    %234 = vmatprep.mubr.f32.mxu0 0.0
    %235 = vmatmul.mubr.f32.gmra.mxu0 %v164
    %v236 = vpop.f32.mrf.mxu0
    %v237 = vadd.f32 0.0, %v236
    %v238 = vpop.f32.mrf.mxu0
    %239 = vdwg.mxu0
    %vm240 = vcmask 261120
    %v242 = vsel %vm240, %v155, 0
    %244 = vmatprep.subr.mxu0 0.0
    %245 = vmatpush1.msra.mxu0 0.0
    %246 = vmatprep.subr.mxu0 0.0
    %247 = vmatpush1.msra.mxu0 0.0
    %248 = vmatprep.subr.mxu0 0.0
    %249 = vmatpush1.msra.mxu0 0.0
    %250 = vmatprep.subr.mxu0 0.0
    %251 = vmatpush1.msra.mxu0 0.0
    %252 = vmatprep.subr.mxu0 0.0
    %253 = vmatpush1.msra.mxu0 0.0
    %254 = vmatprep.subr.mxu0 0.0
    %255 = vmatpush1.msra.mxu0 0.0
    %256 = vmatprep.subr.mxu0 0.0
    %257 = vmatpush1.msra.mxu0 0.0
    %258 = vmatprep.subr.mxu0 0.0
    %259 = vmatpush1.msra.mxu0 0.0
    %260 = vmatprep.subr.mxu0 0.0
    %261 = vmatpush1.msra.mxu0 0.0
    %262 = vmatprep.subr.mxu0 0.0
    %263 = vmatpush1.msra.mxu0 0.0
    %264 = vmatprep.subr.mxu0 0.0
    %265 = vmatpush1.msra.mxu0 0.0
    %266 = vmatprep.subr.mxu0 0.0
    %267 = vmatpush1.msra.mxu0 0.0
    %268 = vmatprep.subr.mxu0 0.0
    %269 = vmatpush1.msra.mxu0 %v159
    %270 = vmatprep.subr.mxu0 0.0
    %271 = vmatpush1.msra.mxu0 %v158
    %272 = vmatprep.subr.mxu0 0.0
    %273 = vmatpush1.msra.mxu0 %v157
    %274 = vmatprep.subr.mxu0 0.0
    %275 = vmatpush1.msra.mxu0 %v156
    %276 = vmatprep.subr.mxu0 0.0
    %277 = vmatpush2.msra.mxu0 0.0
    %278 = vmatprep.subr.mxu0 0.0
    %279 = vmatpush2.msra.mxu0 0.0
    %280 = vmatprep.subr.mxu0 0.0
    %281 = vmatpush2.msra.mxu0 0.0
    %282 = vmatprep.subr.mxu0 0.0
    %283 = vmatpush2.msra.mxu0 0.0
    %284 = vmatprep.subr.mxu0 0.0
    %285 = vmatpush2.msra.mxu0 0.0
    %286 = vmatprep.subr.mxu0 0.0
    %287 = vmatpush2.msra.mxu0 0.0
    %288 = vmatprep.subr.mxu0 0.0
    %289 = vmatpush2.msra.mxu0 0.0
    %290 = vmatprep.subr.mxu0 0.0
    %291 = vmatpush2.msra.mxu0 0.0
    %292 = vmatprep.subr.mxu0 0.0
    %293 = vmatpush2.msra.mxu0 0.0
    %294 = vmatprep.subr.mxu0 0.0
    %295 = vmatpush2.msra.mxu0 0.0
    %296 = vmatprep.subr.mxu0 0.0
    %297 = vmatpush2.msra.mxu0 0.0
    %298 = vmatprep.subr.mxu0 0.0
    %299 = vmatpush2.msra.mxu0 0.0
    %300 = vmatprep.subr.mxu0 0.0
    %301 = vmatpush2.msra.mxu0 0.0
    %302 = vmatprep.subr.mxu0 0.0
    %303 = vmatpush2.msra.mxu0 0.0
    %304 = vmatprep.subr.mxu0 0.0
    %305 = vmatpush2.msra.mxu0 0.0
    %306 = vmatprep.subr.mxu0 0.0
    %307 = vmatpush2.msra.mxu0 0.0
    %308 = vmatprep.mubr.f32.mxu0 0.0
    %309 = vmatmul.mubr.f32.gmra.mxu0 %v242
    %v310 = vpop.f32.mrf.mxu0
    %v311 = vadd.f32 %v237, %v310
    %v312 = vpop.f32.mrf.mxu0
    %313 = vdwg.mxu0
    %v314 = vld [vmem:[#allocation7] sm:$0x1]
    %v316 = vlaneseq
    %v317 = vshrl.u32 %v316, 7
    %v318 = vsub.s32 0, %v317
    %v319 = vrot.slane %v314, %v318
    %v321 = vadd.f32 %v311, %v319
    %v322 = vmax.f32 %v321, 0.0
    %v323 = vld [vmem:[%s7] sm:$0xff]
    %v324 = vld [vmem:[%s7 + $0x8] sm:$0xff]
    %v325 = vld [vmem:[%s7 + $0x10] sm:$0xff]
    %v326 = vld [vmem:[%s7 + $0x18] sm:$0xff]
    %v327 = vld [vmem:[%s8] sm:$0x1]
    %v329 = vlaneseq
    %v330 = vshrl.u32 %v329, 7
    %v331 = vsub.s32 0, %v330
    %v332 = vrot.slane %v327, %v331
    %v335 = vsel %vm240, %v322, 0
    %337 = vmatprep.subr.mxu0 0.0
    %338 = vmatpush1.msra.mxu0 0.0
    %339 = vmatprep.subr.mxu0 0.0
    %340 = vmatpush1.msra.mxu0 0.0
    %341 = vmatprep.subr.mxu0 0.0
    %342 = vmatpush1.msra.mxu0 0.0
    %343 = vmatprep.subr.mxu0 0.0
    %344 = vmatpush1.msra.mxu0 0.0
    %345 = vmatprep.subr.mxu0 0.0
    %346 = vmatpush1.msra.mxu0 0.0
    %347 = vmatprep.subr.mxu0 0.0
    %348 = vmatpush1.msra.mxu0 0.0
    %349 = vmatprep.subr.mxu0 0.0
    %350 = vmatpush1.msra.mxu0 0.0
    %351 = vmatprep.subr.mxu0 0.0
    %352 = vmatpush1.msra.mxu0 0.0
    %353 = vmatprep.subr.mxu0 0.0
    %354 = vmatpush1.msra.mxu0 0.0
    %355 = vmatprep.subr.mxu0 0.0
    %356 = vmatpush1.msra.mxu0 0.0
    %357 = vmatprep.subr.mxu0 0.0
    %358 = vmatpush1.msra.mxu0 0.0
    %359 = vmatprep.subr.mxu0 0.0
    %360 = vmatpush1.msra.mxu0 0.0
    %361 = vmatprep.subr.mxu0 0.0
    %362 = vmatpush1.msra.mxu0 %v326
    %363 = vmatprep.subr.mxu0 0.0
    %364 = vmatpush1.msra.mxu0 %v325
    %365 = vmatprep.subr.mxu0 0.0
    %366 = vmatpush1.msra.mxu0 %v324
    %367 = vmatprep.subr.mxu0 0.0
    %368 = vmatpush1.msra.mxu0 %v323
    %369 = vmatprep.subr.mxu0 0.0
    %370 = vmatpush2.msra.mxu0 0.0
    %371 = vmatprep.subr.mxu0 0.0
    %372 = vmatpush2.msra.mxu0 0.0
    %373 = vmatprep.subr.mxu0 0.0
    %374 = vmatpush2.msra.mxu0 0.0
    %375 = vmatprep.subr.mxu0 0.0
    %376 = vmatpush2.msra.mxu0 0.0
    %377 = vmatprep.subr.mxu0 0.0
    %378 = vmatpush2.msra.mxu0 0.0
    %379 = vmatprep.subr.mxu0 0.0
    %380 = vmatpush2.msra.mxu0 0.0
    %381 = vmatprep.subr.mxu0 0.0
    %382 = vmatpush2.msra.mxu0 0.0
    %383 = vmatprep.subr.mxu0 0.0
    %384 = vmatpush2.msra.mxu0 0.0
    %385 = vmatprep.subr.mxu0 0.0
    %386 = vmatpush2.msra.mxu0 0.0
    %387 = vmatprep.subr.mxu0 0.0
    %388 = vmatpush2.msra.mxu0 0.0
    %389 = vmatprep.subr.mxu0 0.0
    %390 = vmatpush2.msra.mxu0 0.0
    %391 = vmatprep.subr.mxu0 0.0
    %392 = vmatpush2.msra.mxu0 0.0
    %393 = vmatprep.subr.mxu0 0.0
    %394 = vmatpush2.msra.mxu0 0.0
    %395 = vmatprep.subr.mxu0 0.0
    %396 = vmatpush2.msra.mxu0 0.0
    %397 = vmatprep.subr.mxu0 0.0
    %398 = vmatpush2.msra.mxu0 0.0
    %399 = vmatprep.subr.mxu0 0.0
    %400 = vmatpush2.msra.mxu0 0.0
    %401 = vmatprep.mubr.f32.mxu0 0.0
    %402 = vmatmul.mubr.f32.gmra.mxu0 %v335
    %v403 = vpop.f32.mrf.mxu0
    %v404 = vadd.f32 %v332, %v403
    %v405 = vpop.f32.mrf.mxu0
    %406 = vdwg.mxu0
    %407 = vst.msk [vmem:[#allocation8] sm:$0xff] %vm81, %v404
    %409 = vrot.lane.b32.xlu0 %v404, 112
    %v410 = vpop.permute.xlu0 %409
    %vm412 = vcmask 7168
    %413 = vst.msk [vmem:[%s9] sm:$0xff] %vm412, %v410
    %v414 = vxor.u32 %v404, 2147483648
    %v415 = vmul.f32 %v414, 1.442695
    %v416 = vpow.pop %v415
    %v417 = vadd.f32 %v416, 1.0
    %v418 = vrcp.pop %v417
    %v419 = vmul.f32 1.0, %v418
    %421 = vrot.lane.b32.xlu0 %v419, 111
    %v422 = vpop.permute.xlu0 %421
    %424 = vst.msk [vmem:[%s11] sm:$0xff] %vm412, %v422
    // Predicated region
    $region50: #{tpu_custom_call.1} parent=1 // pred_check
      _
    $region51: #{tpu_custom_call.1} parent=1 // pred_check_branch
      %426 = sbr.rel (0) target = $region53
    $region52: #{tpu_custom_call.1} parent=1 // pred_region
      _
    $region53: #{tpu_custom_call.1} parent=1 // pred_fallthru
      _
    // Predicated region
    $region54: #{tpu_custom_call.1} parent=1 // pred_check
      _
    $region55: #{tpu_custom_call.1} parent=1 // pred_check_branch
      %428 = sbr.rel (0) target = $region57
    $region56: #{tpu_custom_call.1} parent=1 // pred_region
      %s430 = ssub.s32 128, 128
      %431 = vsyncadd [#allocation4], %s430
      %s433 = sshll.u32 [#allocation8], 4
      %s434 = int_to_ptr.vmem [resolvable:$true] %s433
      %436 = dma.vmem_to_hbm [thread:$0]  %s434, 128, %s10, [#allocation4]
    $region57: #{tpu_custom_call.1} parent=1 // pred_fallthru
      _
    // Predicated region
    $region58: #{tpu_custom_call.1} parent=1 // pred_check
      _
    $region59: #{tpu_custom_call.1} parent=1 // pred_check_branch
      %438 = sbr.rel (0) target = $region61
    $region60: #{tpu_custom_call.1} parent=1 // pred_region
      _
    $region61: #{tpu_custom_call.1} parent=1 // pred_fallthru
      _
    // Predicated region
    $region62: #{tpu_custom_call.1} parent=1 // pred_check
      _
    $region63: #{tpu_custom_call.1} parent=1 // pred_check_branch
      %440 = sbr.rel (0) target = $region65
    $region64: #{tpu_custom_call.1} parent=1 // pred_region
      _
    $region65: #{tpu_custom_call.1} parent=1 // pred_fallthru
      _
    // Predicated region
    $region66: #{tpu_custom_call.1} parent=1 // pred_check
      _
    $region67: #{tpu_custom_call.1} parent=1 // pred_check_branch
      %442 = sbr.rel (0) target = $region69
    $region68: #{tpu_custom_call.1} parent=1 // pred_region
      %443 = dma.done [#allocation4], 128
    $region69: #{tpu_custom_call.1} parent=1 // pred_fallthru
      _
    // Predicated region
    $region70: #{tpu_custom_call.1} parent=1 // pred_check
      _
    $region71: #{tpu_custom_call.1} parent=1 // pred_check_branch
      %445 = sbr.rel (0) target = $region73
    $region72: #{tpu_custom_call.1} parent=1 // pred_region
      _
    $region73: #{tpu_custom_call.1} parent=1 // pred_fallthru
      _
    %446 = vsyncpa [#allocation3], 1
    %447 = vsyncpa [#allocation6], 1
    %448 = vsyncpa [#allocation4], 1

</llo_original>
